<compile_context>
chip_gen: v5e
topology: v5e:2x2
jax: 0.10.0
libtpu: 0.0.40
codegen_flags: <defaults>
</compile_context>

<pallas_src>
import jax
import jax.numpy as jnp
from jax.experimental import pallas as pl
from jax.experimental.pallas import tpu as pltpu

INPUT_SIZE = 28 * 28        # 784
NUM_CLASSES = 10
PADDED_CLASSES = 128        # lane-dense output width
MAX_TB = 2048               # max batch-tile rows (fits scoped VMEM on v5e/v6e/v7x)


def _linear_kernel(x_ref, w_ref, b_ref, o_ref):
    # x_ref: (TB, 784) f32   w_ref: (784, 128) bf16   b_ref: (1, 128) f32
    # o_ref: (TB, 128) bf16
    x = x_ref[...].astype(jnp.bfloat16)            # in-register cast (free vs DMA)
    acc = jnp.dot(x, w_ref[...], preferred_element_type=jnp.float32)
    o_ref[...] = (acc + b_ref[...]).astype(o_ref.dtype)


def _round_up(x, m):
    return ((x + m - 1) // m) * m


def mnist_model_forward(xb, w_t, b):
    """Forward pass of MnistModel.

    xb  : (B, 1, 28, 28) or any shape reshapable to (-1, 784), float32
    w_t : (784, 10) float32  (transposed nn.Linear weight)
    b   : (10,) float32
    returns (B, 10) float32 logits
    """
    x2d = xb.reshape(-1, INPUT_SIZE)
    batch = x2d.shape[0]

    # Tile selection: cdiv-based so padding waste per tile is < 8 rows, and at
    # least 2 grid steps for non-trivial batches (v7x dual-TensorCore sharding).
    min_tiles = 2 if batch >= 16 else 1
    ntiles = max(min_tiles, pl.cdiv(batch, MAX_TB))
    tb = min(MAX_TB, _round_up(pl.cdiv(batch, ntiles), 8))
    grid = (pl.cdiv(batch, tb),)

    # Resident weight / bias: pad output lane dim 10 -> 128 with zero columns
    # (tiny one-time host op; ~200 KiB bf16 lives in VMEM for the whole grid).
    w_p = jnp.zeros((INPUT_SIZE, PADDED_CLASSES), jnp.bfloat16)
    w_p = w_p.at[:, :NUM_CLASSES].set(w_t.astype(jnp.bfloat16))
    b_p = jnp.zeros((1, PADDED_CLASSES), jnp.float32)
    b_p = b_p.at[0, :NUM_CLASSES].set(b.astype(jnp.float32))

    bytes_accessed = (batch * INPUT_SIZE * 4          # f32 activation read
                      + w_p.size * 2 + b_p.size * 4   # resident params
                      + batch * PADDED_CLASSES * 2)   # bf16 logits writeback
    cost = pl.CostEstimate(
        flops=2 * grid[0] * tb * INPUT_SIZE * PADDED_CLASSES,
        transcendentals=0,
        bytes_accessed=bytes_accessed,
    )

    out = pl.pallas_call(
        _linear_kernel,
        out_shape=jax.ShapeDtypeStruct((batch, PADDED_CLASSES), jnp.bfloat16),
        grid_spec=pltpu.PrefetchScalarGridSpec(
            num_scalar_prefetch=0,
            grid=grid,
            in_specs=[
                pl.BlockSpec((tb, INPUT_SIZE), lambda i: (i, 0)),              # x tile (f32)
                pl.BlockSpec((INPUT_SIZE, PADDED_CLASSES), lambda i: (0, 0)),  # W resident
                pl.BlockSpec((1, PADDED_CLASSES), lambda i: (0, 0)),           # bias resident
            ],
            out_specs=pl.BlockSpec((tb, PADDED_CLASSES), lambda i: (i, 0)),
        ),
        compiler_params=pltpu.CompilerParams(
            dimension_semantics=("parallel",),
            vmem_limit_bytes=32 * 1024 * 1024,
        ),
        cost_estimate=cost,
    )(x2d, w_p, b_p)

    # Lane slice + f32 cast fuse into one small XLA op (only 40 B/row real data).
    return out[:, :NUM_CLASSES].astype(jnp.float32)


def init_params(key):
    """Deterministic init matching nn.Linear(784, 10) shapes.

    Uses uniform(-1/sqrt(784), 1/sqrt(784)) like PyTorch's default init.
    Returns weight already transposed to (784, 10) plus bias (10,).
    """
    kw, kb = jax.random.split(key)
    bound = 1.0 / jnp.sqrt(jnp.float32(INPUT_SIZE))
    w = jax.random.uniform(
        kw, (NUM_CLASSES, INPUT_SIZE), jnp.float32, -bound, bound)
    b = jax.random.uniform(kb, (NUM_CLASSES,), jnp.float32, -bound, bound)
    return w.T, b   # store transposed for the kernel


if __name__ == "__main__":
    key = jax.random.PRNGKey(0)
    k_x, k_p = jax.random.split(key)

    batch = 8
    # MNIST-style NCHW input
    xb = jax.random.normal(k_x, (batch, 1, 28, 28), dtype=jnp.float32)

    w_t, b = init_params(k_p)

    logits = mnist_model_forward(xb, w_t, b)
    logits = jax.block_until_ready(logits)

    # Reference with the same bf16 input quantization, f32 accumulate, and the
    # same final bf16 rounding of the logits (flagged tolerance vs pure-f32
    # PyTorch: bf16 quantization changes logits at the ~1e-2 level).
    x_ref = xb.reshape(-1, INPUT_SIZE).astype(jnp.bfloat16).astype(jnp.float32)
    w_ref = w_t.astype(jnp.bfloat16).astype(jnp.float32)
    ref = x_ref @ w_ref + b.reshape(1, NUM_CLASSES)
    ref = ref.astype(jnp.bfloat16).astype(jnp.float32)

    assert logits.shape == (batch, NUM_CLASSES)
    assert logits.dtype == jnp.float32
    assert jnp.allclose(logits, ref, atol=2e-2, rtol=2e-2)

    print("KERNEL_OK")
</pallas_src>

<mosaic_0001>
module attributes {stable_mosaic.version = 11 : i64} {
  func.func @_linear_kernel(%arg0: i32, %arg1: memref<8x784xf32, #tpu.memory_space<vmem>>, %arg2: memref<784x128xbf16, #tpu.memory_space<vmem>>, %arg3: memref<1x128xf32, #tpu.memory_space<vmem>>, %arg4: memref<8x128xbf16, #tpu.memory_space<vmem>>) attributes {dimension_semantics = [#tpu.dimension_semantics<parallel>], iteration_bounds = array<i64: 1>, scalar_prefetch = 0 : i64, scratch_operands = 0 : i64, tpu.core_type = #tpu.core_type<tc>, window_params = [{transform_indices = @transform_0, window_bounds = array<i64: 8, 784>}, {pipeline_mode = #tpu.pipeline_mode<synchronous>, transform_indices = @transform_1, window_bounds = array<i64: 784, 128>}, {pipeline_mode = #tpu.pipeline_mode<synchronous>, transform_indices = @transform_2, window_bounds = array<i64: 1, 128>}, {transform_indices = @transform_3, window_bounds = array<i64: 8, 128>}]} {
    %c0 = arith.constant 0 : index
    %c0_0 = arith.constant 0 : index
    %0 = vector.load %arg1[%c0, %c0_0] : memref<8x784xf32, #tpu.memory_space<vmem>>, vector<8x784xf32>
    %1 = arith.truncf %0 : vector<8x784xf32> to vector<8x784xbf16>
    %c0_1 = arith.constant 0 : index
    %c0_2 = arith.constant 0 : index
    %2 = vector.load %arg2[%c0_1, %c0_2] : memref<784x128xbf16, #tpu.memory_space<vmem>>, vector<784x128xbf16>
    %cst = arith.constant dense<0.000000e+00> : vector<8x128xf32>
    %3 = tpu.matmul %1, %2, %cst {dimension_numbers = #tpu.dot_dimension_numbers<[1], [0], [0], [1], [0, 0, 1, 1], [], []>} : vector<8x784xbf16>, vector<784x128xbf16>, vector<8x128xf32> -> vector<8x128xf32>
    %c0_3 = arith.constant 0 : index
    %c0_4 = arith.constant 0 : index
    %4 = vector.load %arg3[%c0_3, %c0_4] : memref<1x128xf32, #tpu.memory_space<vmem>>, vector<1x128xf32>
    %5 = vector.broadcast %4 : vector<1x128xf32> to vector<8x128xf32>
    %6 = arith.addf %3, %5 : vector<8x128xf32>
    %7 = arith.truncf %6 : vector<8x128xf32> to vector<8x128xbf16>
    %c0_5 = arith.constant 0 : index
    %c0_6 = arith.constant 0 : index
    %8 = vector.load %arg4[%c0_5, %c0_6] : memref<8x128xbf16, #tpu.memory_space<vmem>>, vector<8x128xbf16>
    tpu.vector_store %arg4[%c0_5, %c0_6], %7 {strides = array<i32>} : memref<8x128xbf16, #tpu.memory_space<vmem>>, vector<8x128xbf16>,
    return
  }
  func.func @transform_0(%arg0: i32) -> (i32, i32) {
    %c0_i32 = arith.constant 0 : i32
    %c0_i32_0 = arith.constant 0 : i32
    return %arg0, %c0_i32 : i32, i32
  }
  func.func @transform_1(%arg0: i32) -> (i32, i32) {
    %c0_i32 = arith.constant 0 : i32
    %c0_i32_0 = arith.constant 0 : i32
    %c0_i32_1 = arith.constant 0 : i32
    return %c0_i32, %c0_i32_0 : i32, i32
  }
  func.func @transform_2(%arg0: i32) -> (i32, i32) {
    %c0_i32 = arith.constant 0 : i32
    %c0_i32_0 = arith.constant 0 : i32
    %c0_i32_1 = arith.constant 0 : i32
    return %c0_i32, %c0_i32_0 : i32, i32
  }
  func.func @transform_3(%arg0: i32) -> (i32, i32) {
    %c0_i32 = arith.constant 0 : i32
    %c0_i32_0 = arith.constant 0 : i32
    return %arg0, %c0_i32 : i32, i32
  }
}

</mosaic_0001>

<llo_original>
// kernel: tpu_custom_call.1
$region0: #{tpu_custom_call.1}
  #allocation0 [shape = 'u32[]', space=smem, size = 0x4, offset = 0x4, fixed_abs, tag = 'smem constant byte address 0x4 - core index']
  #allocation1 [shape = 'u32[72,128]{1,0:T(1,128)}', space=vmem, size = 0x9000, scoped, tag = 'internal scratch']
  %s0 = inlined_call_operand.hbm [shape: f32[8,784], index: 0, kind: input, shape index: {}]
  %s1 = inlined_call_operand.hbm [shape: bf16[784,128], index: 1, kind: input, shape index: {}]
  %s2 = inlined_call_operand.vmem [shape: f32[1,128], index: 2, kind: input, shape index: {}]
  %s3 = inlined_call_operand.hbm [shape: bf16[8,128], index: 3, kind: output, shape index: {}]
  %s4 = sld [smem:[#allocation0]]
  $region30: #{tpu_custom_call.1} parent=0
    _
  %s6 = ssub.s32 1, %s4
  %s7 = scalar_select 0, %s6, %s4
  $region1: #{tpu_custom_call.1} parent=0
    #allocation2 [shape = 'u8[28672]{0}', space=vmem, size = 0x7000, scoped, tag = 'input window, operand 0, single buffered']
    #allocation3 [shape = 's32[1]{0}', space=sflag, size = 0x4, scoped, tag = 'scoped memory for tpu_custom_call.1']
    #allocation4 [shape = 's32[1]{0}', space=sflag, size = 0x4, scoped, tag = 'scoped memory for tpu_custom_call.1']
    #allocation5 [shape = 'u8[200704]{0}', space=vmem, size = 0x31000, scoped, tag = 'input window, operand 1, single buffered']
    #allocation6 [shape = 's32[1]{0}', space=sflag, size = 0x4, scoped, tag = 'scoped memory for tpu_custom_call.1']
    #allocation7 [shape = 'u8[2048]{0}', space=vmem, size = 0x800, scoped, tag = 'output window, operand 0, single buffered']
    %8 = vsyncpa [#allocation3], 0
    %9 = vsyncpa [#allocation6], 0
    %10 = vsyncpa [#allocation4], 0
    // Predicated region
    $region2: #{tpu_custom_call.1} parent=1 // pred_check
      _
    $region3: #{tpu_custom_call.1} parent=1 // pred_check_branch
      %12 = sbr.rel (0) target = $region5
    $region4: #{tpu_custom_call.1} parent=1 // pred_region
      %14 = vsyncadd [#allocation3], 0
      %s16 = sshll.u32 %s0, 4
      %s17 = int_to_ptr.hbm [resolvable:$true] %s16
      %s18 = sshll.u32 [#allocation2], 4
      %s19 = int_to_ptr.vmem [resolvable:$true] %s18
      %21 = dma.hbm_to_vmem [thread:$0]  %s17, 896, %s19, [#allocation3]
    $region5: #{tpu_custom_call.1} parent=1 // pred_fallthru
      _
    // Predicated region
    $region6: #{tpu_custom_call.1} parent=1 // pred_check
      _
    $region7: #{tpu_custom_call.1} parent=1 // pred_check_branch
      %23 = sbr.rel (0) target = $region9
    $region8: #{tpu_custom_call.1} parent=1 // pred_region
      %25 = vsyncadd [#allocation6], 0
      %s26 = sshll.u32 %s1, 4
      %s27 = int_to_ptr.hbm [resolvable:$true] %s26
      %s28 = sshll.u32 [#allocation5], 4
      %s29 = int_to_ptr.vmem [resolvable:$true] %s28
      %34 = dma.hbm_to_vmem [thread:$0]  %s27, 6272, %s29, [#allocation6], 64, 64, 4
    $region9: #{tpu_custom_call.1} parent=1 // pred_fallthru
      _
    // Predicated region
    $region10: #{tpu_custom_call.1} parent=1 // pred_check
      _
    $region11: #{tpu_custom_call.1} parent=1 // pred_check_branch
      %36 = sbr.rel (0) target = $region13
    $region12: #{tpu_custom_call.1} parent=1 // pred_region
      _
    $region13: #{tpu_custom_call.1} parent=1 // pred_fallthru
      _
    // Predicated region
    $region14: #{tpu_custom_call.1} parent=1 // pred_check
      _
    $region15: #{tpu_custom_call.1} parent=1 // pred_check_branch
      %38 = sbr.rel (0) target = $region17
    $region16: #{tpu_custom_call.1} parent=1 // pred_region
      %40 = dma.done [#allocation3], 896
    $region17: #{tpu_custom_call.1} parent=1 // pred_fallthru
      _
    // Predicated region
    $region18: #{tpu_custom_call.1} parent=1 // pred_check
      _
    $region19: #{tpu_custom_call.1} parent=1 // pred_check_branch
      %42 = sbr.rel (0) target = $region21
    $region20: #{tpu_custom_call.1} parent=1 // pred_region
      %44 = dma.done [#allocation6], 6272
    $region21: #{tpu_custom_call.1} parent=1 // pred_fallthru
      _
    %v46 = vld [vmem:[#allocation2] sm:$0xff]
    %v47 = vld [vmem:[#allocation2 + $0x8] sm:$0xff]
    %v48 = vld [vmem:[#allocation2 + $0x10] sm:$0xff]
    %v49 = vld [vmem:[#allocation2 + $0x18] sm:$0xff]
    %v50 = vld [vmem:[#allocation2 + $0x20] sm:$0xff]
    %v51 = vld [vmem:[#allocation2 + $0x28] sm:$0xff]
    %v52 = vld [vmem:[#allocation2 + $0x30] sm:$0xff]
    %v53 = vpack.c.bf16 %v46, %v46
    %v54 = vpack.c.bf16 %v47, %v47
    %v55 = vpack.c.bf16 %v48, %v48
    %v56 = vpack.c.bf16 %v49, %v49
    %v57 = vpack.c.bf16 %v50, %v50
    %v58 = vpack.c.bf16 %v51, %v51
    %v59 = vpack.c.bf16 %v52, %v52
    %v60 = vld [vmem:[#allocation5] sm:$0xf]
    %v61 = vld [vmem:[#allocation5 + $0x4] sm:$0xf]
    %v62 = vld [vmem:[#allocation5 + $0x8] sm:$0xf]
    %v63 = vld [vmem:[#allocation5 + $0xc] sm:$0xf]
    %v64 = vld [vmem:[#allocation5 + $0x10] sm:$0xf]
    %v65 = vld [vmem:[#allocation5 + $0x14] sm:$0xf]
    %v66 = vld [vmem:[#allocation5 + $0x18] sm:$0xf]
    %v67 = vld [vmem:[#allocation5 + $0x1c] sm:$0xf]
    %v68 = vld [vmem:[#allocation5 + $0x20] sm:$0xf]
    %v69 = vld [vmem:[#allocation5 + $0x24] sm:$0xf]
    %v70 = vld [vmem:[#allocation5 + $0x28] sm:$0xf]
    %v71 = vld [vmem:[#allocation5 + $0x2c] sm:$0xf]
    %v72 = vld [vmem:[#allocation5 + $0x30] sm:$0xf]
    %v73 = vld [vmem:[#allocation5 + $0x34] sm:$0xf]
    %v74 = vld [vmem:[#allocation5 + $0x38] sm:$0xf]
    %v75 = vld [vmem:[#allocation5 + $0x3c] sm:$0xf]
    %v76 = vld [vmem:[#allocation5 + $0x40] sm:$0xf]
    %v77 = vld [vmem:[#allocation5 + $0x44] sm:$0xf]
    %v78 = vld [vmem:[#allocation5 + $0x48] sm:$0xf]
    %v79 = vld [vmem:[#allocation5 + $0x4c] sm:$0xf]
    %v80 = vld [vmem:[#allocation5 + $0x50] sm:$0xf]
    %v81 = vld [vmem:[#allocation5 + $0x54] sm:$0xf]
    %v82 = vld [vmem:[#allocation5 + $0x58] sm:$0xf]
    %v83 = vld [vmem:[#allocation5 + $0x5c] sm:$0xf]
    %v84 = vld [vmem:[#allocation5 + $0x60] sm:$0xf]
    %v85 = vld [vmem:[#allocation5 + $0x64] sm:$0xf]
    %v86 = vld [vmem:[#allocation5 + $0x68] sm:$0xf]
    %v87 = vld [vmem:[#allocation5 + $0x6c] sm:$0xf]
    %v88 = vld [vmem:[#allocation5 + $0x70] sm:$0xf]
    %v89 = vld [vmem:[#allocation5 + $0x74] sm:$0xf]
    %v90 = vld [vmem:[#allocation5 + $0x78] sm:$0xf]
    %v91 = vld [vmem:[#allocation5 + $0x7c] sm:$0xf]
    %v92 = vld [vmem:[#allocation5 + $0x80] sm:$0xf]
    %v93 = vld [vmem:[#allocation5 + $0x84] sm:$0xf]
    %v94 = vld [vmem:[#allocation5 + $0x88] sm:$0xf]
    %v95 = vld [vmem:[#allocation5 + $0x8c] sm:$0xf]
    %v96 = vld [vmem:[#allocation5 + $0x90] sm:$0xf]
    %v97 = vld [vmem:[#allocation5 + $0x94] sm:$0xf]
    %v98 = vld [vmem:[#allocation5 + $0x98] sm:$0xf]
    %v99 = vld [vmem:[#allocation5 + $0x9c] sm:$0xf]
    %v100 = vld [vmem:[#allocation5 + $0xa0] sm:$0xf]
    %v101 = vld [vmem:[#allocation5 + $0xa4] sm:$0xf]
    %v102 = vld [vmem:[#allocation5 + $0xa8] sm:$0xf]
    %v103 = vld [vmem:[#allocation5 + $0xac] sm:$0xf]
    %v104 = vld [vmem:[#allocation5 + $0xb0] sm:$0xf]
    %v105 = vld [vmem:[#allocation5 + $0xb4] sm:$0xf]
    %v106 = vld [vmem:[#allocation5 + $0xb8] sm:$0xf]
    %v107 = vld [vmem:[#allocation5 + $0xbc] sm:$0xf]
    %v108 = vld [vmem:[#allocation5 + $0xc0] sm:$0xf]
    %v109 = vld [vmem:[#allocation5 + $0xc4] sm:$0xf]
    %v110 = vld [vmem:[#allocation5 + $0xc8] sm:$0xf]
    %v111 = vld [vmem:[#allocation5 + $0xcc] sm:$0xf]
    %v112 = vld [vmem:[#allocation5 + $0xd0] sm:$0xf]
    %v113 = vld [vmem:[#allocation5 + $0xd4] sm:$0xf]
    %v114 = vld [vmem:[#allocation5 + $0xd8] sm:$0xf]
    %v115 = vld [vmem:[#allocation5 + $0xdc] sm:$0xf]
    %v116 = vld [vmem:[#allocation5 + $0xe0] sm:$0xf]
    %v117 = vld [vmem:[#allocation5 + $0xe4] sm:$0xf]
    %v118 = vld [vmem:[#allocation5 + $0xe8] sm:$0xf]
    %v119 = vld [vmem:[#allocation5 + $0xec] sm:$0xf]
    %v120 = vld [vmem:[#allocation5 + $0xf0] sm:$0xf]
    %v121 = vld [vmem:[#allocation5 + $0xf4] sm:$0xf]
    %v122 = vld [vmem:[#allocation5 + $0xf8] sm:$0xf]
    %v123 = vld [vmem:[#allocation5 + $0xfc] sm:$0xf]
    %v124 = vld [vmem:[#allocation5 + $0x100] sm:$0xf]
    %v125 = vld [vmem:[#allocation5 + $0x104] sm:$0xf]
    %v126 = vld [vmem:[#allocation5 + $0x108] sm:$0xf]
    %v127 = vld [vmem:[#allocation5 + $0x10c] sm:$0xf]
    %v128 = vld [vmem:[#allocation5 + $0x110] sm:$0xf]
    %v129 = vld [vmem:[#allocation5 + $0x114] sm:$0xf]
    %v130 = vld [vmem:[#allocation5 + $0x118] sm:$0xf]
    %v131 = vld [vmem:[#allocation5 + $0x11c] sm:$0xf]
    %v132 = vld [vmem:[#allocation5 + $0x120] sm:$0xf]
    %v133 = vld [vmem:[#allocation5 + $0x124] sm:$0xf]
    %v134 = vld [vmem:[#allocation5 + $0x128] sm:$0xf]
    %v135 = vld [vmem:[#allocation5 + $0x12c] sm:$0xf]
    %v136 = vld [vmem:[#allocation5 + $0x130] sm:$0xf]
    %v137 = vld [vmem:[#allocation5 + $0x134] sm:$0xf]
    %v138 = vld [vmem:[#allocation5 + $0x138] sm:$0xf]
    %v139 = vld [vmem:[#allocation5 + $0x13c] sm:$0xf]
    %v140 = vld [vmem:[#allocation5 + $0x140] sm:$0xf]
    %v141 = vld [vmem:[#allocation5 + $0x144] sm:$0xf]
    %v142 = vld [vmem:[#allocation5 + $0x148] sm:$0xf]
    %v143 = vld [vmem:[#allocation5 + $0x14c] sm:$0xf]
    %v144 = vld [vmem:[#allocation5 + $0x150] sm:$0xf]
    %v145 = vld [vmem:[#allocation5 + $0x154] sm:$0xf]
    %v146 = vld [vmem:[#allocation5 + $0x158] sm:$0xf]
    %v147 = vld [vmem:[#allocation5 + $0x15c] sm:$0xf]
    %v148 = vld [vmem:[#allocation5 + $0x160] sm:$0xf]
    %v149 = vld [vmem:[#allocation5 + $0x164] sm:$0xf]
    %v150 = vld [vmem:[#allocation5 + $0x168] sm:$0xf]
    %v151 = vld [vmem:[#allocation5 + $0x16c] sm:$0xf]
    %v152 = vld [vmem:[#allocation5 + $0x170] sm:$0xf]
    %v153 = vld [vmem:[#allocation5 + $0x174] sm:$0xf]
    %v154 = vld [vmem:[#allocation5 + $0x178] sm:$0xf]
    %v155 = vld [vmem:[#allocation5 + $0x17c] sm:$0xf]
    %v156 = vld [vmem:[#allocation5 + $0x180] sm:$0xf]
    %v157 = vld [vmem:[#allocation5 + $0x184] sm:$0xf]
    %v158 = vld [vmem:[%s2] sm:$0x1]
    %v160 = vperm.slane %v158, 0
    %v260 = vunpack.c.l.b16 %v60
    %v261 = vunpack.c.l.b16 %v61
    %v262 = vunpack.c.l.b16 %v62
    %v263 = vunpack.c.l.b16 %v63
    %v264 = vunpack.c.l.b16 %v64
    %v265 = vunpack.c.l.b16 %v65
    %v266 = vunpack.c.l.b16 %v66
    %v267 = vunpack.c.l.b16 %v67
    %v268 = vunpack.c.l.b16 %v68
    %v269 = vunpack.c.l.b16 %v69
    %v270 = vunpack.c.l.b16 %v70
    %v271 = vunpack.c.l.b16 %v71
    %v272 = vunpack.c.l.b16 %v72
    %v273 = vunpack.c.l.b16 %v73
    %v274 = vunpack.c.l.b16 %v74
    %v275 = vunpack.c.l.b16 %v75
    %v276 = vunpack.c.l.b16 %v76
    %v277 = vunpack.c.l.b16 %v77
    %v278 = vunpack.c.l.b16 %v78
    %v279 = vunpack.c.l.b16 %v79
    %v280 = vunpack.c.l.b16 %v80
    %v281 = vunpack.c.l.b16 %v81
    %v282 = vunpack.c.l.b16 %v82
    %v283 = vunpack.c.l.b16 %v83
    %v284 = vunpack.c.l.b16 %v84
    %v285 = vunpack.c.l.b16 %v85
    %v286 = vunpack.c.l.b16 %v86
    %v287 = vunpack.c.l.b16 %v87
    %v288 = vunpack.c.l.b16 %v88
    %v289 = vunpack.c.l.b16 %v89
    %v290 = vunpack.c.l.b16 %v90
    %v291 = vunpack.c.l.b16 %v91
    %v292 = vunpack.c.l.b16 %v92
    %v293 = vunpack.c.l.b16 %v93
    %v294 = vunpack.c.l.b16 %v94
    %v295 = vunpack.c.l.b16 %v95
    %v296 = vunpack.c.l.b16 %v96
    %v297 = vunpack.c.l.b16 %v97
    %v298 = vunpack.c.l.b16 %v98
    %v299 = vunpack.c.l.b16 %v99
    %v300 = vunpack.c.l.b16 %v100
    %v301 = vunpack.c.l.b16 %v101
    %v302 = vunpack.c.l.b16 %v102
    %v303 = vunpack.c.l.b16 %v103
    %v304 = vunpack.c.l.b16 %v104
    %v305 = vunpack.c.l.b16 %v105
    %v306 = vunpack.c.l.b16 %v106
    %v307 = vunpack.c.l.b16 %v107
    %v308 = vunpack.c.l.b16 %v108
    %v309 = vunpack.c.l.b16 %v109
    %v310 = vunpack.c.l.b16 %v110
    %v311 = vunpack.c.l.b16 %v111
    %v312 = vunpack.c.l.b16 %v112
    %v313 = vunpack.c.l.b16 %v113
    %v314 = vunpack.c.l.b16 %v114
    %v315 = vunpack.c.l.b16 %v115
    %v316 = vunpack.c.l.b16 %v116
    %v317 = vunpack.c.l.b16 %v117
    %v318 = vunpack.c.l.b16 %v118
    %v319 = vunpack.c.l.b16 %v119
    %v320 = vunpack.c.l.b16 %v120
    %v321 = vunpack.c.l.b16 %v121
    %v322 = vunpack.c.l.b16 %v122
    %v323 = vunpack.c.l.b16 %v123
    %v324 = vunpack.c.l.b16 %v124
    %v325 = vunpack.c.l.b16 %v125
    %v326 = vunpack.c.l.b16 %v126
    %v327 = vunpack.c.l.b16 %v127
    %v328 = vunpack.c.l.b16 %v128
    %v329 = vunpack.c.l.b16 %v129
    %v330 = vunpack.c.l.b16 %v130
    %v331 = vunpack.c.l.b16 %v131
    %v332 = vunpack.c.l.b16 %v132
    %v333 = vunpack.c.l.b16 %v133
    %v334 = vunpack.c.l.b16 %v134
    %v335 = vunpack.c.l.b16 %v135
    %v336 = vunpack.c.l.b16 %v136
    %v337 = vunpack.c.l.b16 %v137
    %v338 = vunpack.c.l.b16 %v138
    %v339 = vunpack.c.l.b16 %v139
    %v340 = vunpack.c.l.b16 %v140
    %v341 = vunpack.c.l.b16 %v141
    %v342 = vunpack.c.l.b16 %v142
    %v343 = vunpack.c.l.b16 %v143
    %v344 = vunpack.c.l.b16 %v144
    %v345 = vunpack.c.l.b16 %v145
    %v346 = vunpack.c.l.b16 %v146
    %v347 = vunpack.c.l.b16 %v147
    %v348 = vunpack.c.l.b16 %v148
    %v349 = vunpack.c.l.b16 %v149
    %v350 = vunpack.c.l.b16 %v150
    %v351 = vunpack.c.l.b16 %v151
    %v352 = vunpack.c.l.b16 %v152
    %v353 = vunpack.c.l.b16 %v153
    %v354 = vunpack.c.l.b16 %v154
    %v355 = vunpack.c.l.b16 %v155
    %v356 = vunpack.c.l.b16 %v156
    %v357 = vunpack.c.l.b16 %v157
    %v358 = vpack.c.b16 %v261, %v260
    %v359 = vpack.c.b16 %v263, %v262
    %v360 = vpack.c.b16 %v265, %v264
    %v361 = vpack.c.b16 %v267, %v266
    %v362 = vpack.c.b16 %v269, %v268
    %v363 = vpack.c.b16 %v271, %v270
    %v364 = vpack.c.b16 %v273, %v272
    %v365 = vpack.c.b16 %v275, %v274
    %v366 = vpack.c.b16 %v277, %v276
    %v367 = vpack.c.b16 %v279, %v278
    %v368 = vpack.c.b16 %v281, %v280
    %v369 = vpack.c.b16 %v283, %v282
    %v370 = vpack.c.b16 %v285, %v284
    %v371 = vpack.c.b16 %v287, %v286
    %v372 = vpack.c.b16 %v289, %v288
    %v373 = vpack.c.b16 %v291, %v290
    %v374 = vpack.c.b16 %v293, %v292
    %v375 = vpack.c.b16 %v295, %v294
    %v376 = vpack.c.b16 %v297, %v296
    %v377 = vpack.c.b16 %v299, %v298
    %v378 = vpack.c.b16 %v301, %v300
    %v379 = vpack.c.b16 %v303, %v302
    %v380 = vpack.c.b16 %v305, %v304
    %v381 = vpack.c.b16 %v307, %v306
    %v382 = vpack.c.b16 %v309, %v308
    %v383 = vpack.c.b16 %v311, %v310
    %v384 = vpack.c.b16 %v313, %v312
    %v385 = vpack.c.b16 %v315, %v314
    %v386 = vpack.c.b16 %v317, %v316
    %v387 = vpack.c.b16 %v319, %v318
    %v388 = vpack.c.b16 %v321, %v320
    %v389 = vpack.c.b16 %v323, %v322
    %v390 = vpack.c.b16 %v325, %v324
    %v391 = vpack.c.b16 %v327, %v326
    %v392 = vpack.c.b16 %v329, %v328
    %v393 = vpack.c.b16 %v331, %v330
    %v394 = vpack.c.b16 %v333, %v332
    %v395 = vpack.c.b16 %v335, %v334
    %v396 = vpack.c.b16 %v337, %v336
    %v397 = vpack.c.b16 %v339, %v338
    %v398 = vpack.c.b16 %v341, %v340
    %v399 = vpack.c.b16 %v343, %v342
    %v400 = vpack.c.b16 %v345, %v344
    %v401 = vpack.c.b16 %v347, %v346
    %v402 = vpack.c.b16 %v349, %v348
    %v403 = vpack.c.b16 %v351, %v350
    %v404 = vpack.c.b16 %v353, %v352
    %v405 = vpack.c.b16 %v355, %v354
    %v406 = vpack.c.b16 %v357, %v356
    %vm456 = vcmask 130048
    %v458 = vsel %vm456, %v59, 0
    %460 = vmatpush.bf16.msra.mxu0 %v365
    %461 = vmatpush.bf16.msra.mxu0 %v364
    %462 = vmatpush.bf16.msra.mxu0 %v363
    %463 = vmatpush.bf16.msra.mxu0 %v362
    %464 = vmatpush.bf16.msra.mxu0 %v361
    %465 = vmatpush.bf16.msra.mxu0 %v360
    %466 = vmatpush.bf16.msra.mxu0 %v359
    %467 = vmatpush.bf16.msra.mxu0 %v358
    %468 = vmatmul.bf16.gmra.mxu0 %v53
    %v469 = vpop.f32.mrf.mxu0
    %v470 = vadd.f32 %v160, %v469
    %v471 = vpop.f32.mrf.mxu0
    %472 = vdwg.mxu0
    %473 = vmatpush.bf16.msra.mxu0 %v373
    %474 = vmatpush.bf16.msra.mxu0 %v372
    %475 = vmatpush.bf16.msra.mxu0 %v371
    %476 = vmatpush.bf16.msra.mxu0 %v370
    %477 = vmatpush.bf16.msra.mxu0 %v369
    %478 = vmatpush.bf16.msra.mxu0 %v368
    %479 = vmatpush.bf16.msra.mxu0 %v367
    %480 = vmatpush.bf16.msra.mxu0 %v366
    %481 = vmatmul.bf16.gmra.mxu0 %v54
    %v482 = vpop.f32.mrf.mxu0
    %v483 = vadd.f32 %v470, %v482
    %v484 = vpop.f32.mrf.mxu0
    %485 = vdwg.mxu0
    %486 = vmatpush.bf16.msra.mxu0 %v381
    %487 = vmatpush.bf16.msra.mxu0 %v380
    %488 = vmatpush.bf16.msra.mxu0 %v379
    %489 = vmatpush.bf16.msra.mxu0 %v378
    %490 = vmatpush.bf16.msra.mxu0 %v377
    %491 = vmatpush.bf16.msra.mxu0 %v376
    %492 = vmatpush.bf16.msra.mxu0 %v375
    %493 = vmatpush.bf16.msra.mxu0 %v374
    %494 = vmatmul.bf16.gmra.mxu0 %v55
    %v495 = vpop.f32.mrf.mxu0
    %v496 = vadd.f32 %v483, %v495
    %v497 = vpop.f32.mrf.mxu0
    %498 = vdwg.mxu0
    %499 = vmatpush.bf16.msra.mxu0 %v389
    %500 = vmatpush.bf16.msra.mxu0 %v388
    %501 = vmatpush.bf16.msra.mxu0 %v387
    %502 = vmatpush.bf16.msra.mxu0 %v386
    %503 = vmatpush.bf16.msra.mxu0 %v385
    %504 = vmatpush.bf16.msra.mxu0 %v384
    %505 = vmatpush.bf16.msra.mxu0 %v383
    %506 = vmatpush.bf16.msra.mxu0 %v382
    %507 = vmatmul.bf16.gmra.mxu0 %v56
    %v508 = vpop.f32.mrf.mxu0
    %v509 = vadd.f32 %v496, %v508
    %v510 = vpop.f32.mrf.mxu0
    %511 = vdwg.mxu0
    %512 = vmatpush.bf16.msra.mxu0 %v397
    %513 = vmatpush.bf16.msra.mxu0 %v396
    %514 = vmatpush.bf16.msra.mxu0 %v395
    %515 = vmatpush.bf16.msra.mxu0 %v394
    %516 = vmatpush.bf16.msra.mxu0 %v393
    %517 = vmatpush.bf16.msra.mxu0 %v392
    %518 = vmatpush.bf16.msra.mxu0 %v391
    %519 = vmatpush.bf16.msra.mxu0 %v390
    %520 = vmatmul.bf16.gmra.mxu0 %v57
    %v521 = vpop.f32.mrf.mxu0
    %v522 = vadd.f32 %v509, %v521
    %v523 = vpop.f32.mrf.mxu0
    %524 = vdwg.mxu0
    %525 = vmatpush.bf16.msra.mxu0 %v405
    %526 = vmatpush.bf16.msra.mxu0 %v404
    %527 = vmatpush.bf16.msra.mxu0 %v403
    %528 = vmatpush.bf16.msra.mxu0 %v402
    %529 = vmatpush.bf16.msra.mxu0 %v401
    %530 = vmatpush.bf16.msra.mxu0 %v400
    %531 = vmatpush.bf16.msra.mxu0 %v399
    %532 = vmatpush.bf16.msra.mxu0 %v398
    %533 = vmatmul.bf16.gmra.mxu0 %v58
    %v534 = vpop.f32.mrf.mxu0
    %v535 = vadd.f32 %v522, %v534
    %v536 = vpop.f32.mrf.mxu0
    %537 = vdwg.mxu0
    %538 = vmatpush.bf16.msra.mxu0 0
    %539 = vmatpush.bf16.msra.mxu0 0
    %540 = vmatpush.bf16.msra.mxu0 0
    %541 = vmatpush.bf16.msra.mxu0 0
    %542 = vmatpush.bf16.msra.mxu0 0
    %543 = vmatpush.bf16.msra.mxu0 0
    %544 = vmatpush.bf16.msra.mxu0 0
    %545 = vmatpush.bf16.msra.mxu0 %v406
    %546 = vmatmul.bf16.gmra.mxu0 %v458
    %v547 = vpop.f32.mrf.mxu0
    %v548 = vadd.f32 %v535, %v547
    %v549 = vpop.f32.mrf.mxu0
    %550 = vdwg.mxu0
    %v551 = vpack.c.bf16 %v548, %v548
    %552 = vst [vmem:[#allocation7] sm:$0xf] %v551
    // Predicated region
    $region22: #{tpu_custom_call.1} parent=1 // pred_check
      _
    $region23: #{tpu_custom_call.1} parent=1 // pred_check_branch
      %554 = sbr.rel (0) target = $region25
    $region24: #{tpu_custom_call.1} parent=1 // pred_region
      %556 = vsyncadd [#allocation4], 0
      %s558 = sshll.u32 [#allocation7], 4
      %s559 = int_to_ptr.vmem [resolvable:$true] %s558
      %s560 = sshll.u32 %s3, 4
      %s561 = int_to_ptr.hbm [resolvable:$true] %s560
      %563 = dma.vmem_to_hbm [thread:$0]  %s559, 64, %s561, [#allocation4]
    $region25: #{tpu_custom_call.1} parent=1 // pred_fallthru
      _
    // Predicated region
    $region26: #{tpu_custom_call.1} parent=1 // pred_check
      _
    $region27: #{tpu_custom_call.1} parent=1 // pred_check_branch
      %565 = sbr.rel (0) target = $region29
    $region28: #{tpu_custom_call.1} parent=1 // pred_region
      %567 = dma.done [#allocation4], 64
    $region29: #{tpu_custom_call.1} parent=1 // pred_fallthru
      _
    %568 = vsyncpa [#allocation3], 1
    %569 = vsyncpa [#allocation6], 1
    %570 = vsyncpa [#allocation4], 1

</llo_original>
